<compile_context>
chip_gen: v7x
topology: tpu7x:2x2x1
jax: 0.10.0
libtpu: 0.0.40
codegen_flags: <defaults>
</compile_context>

<pallas_src>
import jax
import jax.numpy as jnp
from jax.experimental import pallas as pl
from jax.experimental.pallas import tpu as pltpu

SELU_ALPHA = 1.6732632423543772
SELU_SCALE = 1.0507009873554805
HIDDEN_PAD = 128  # lane-dense padding for the 10-wide hidden layers


def _selu(x):
    # Guard exp against large positive args (that branch is discarded anyway).
    neg = jnp.minimum(x, 0.0)
    return jnp.where(x > 0.0, SELU_SCALE * x,
                     SELU_SCALE * SELU_ALPHA * (jnp.exp(neg) - 1.0))


def _round_up(n, m):
    return ((n + m - 1) // m) * m


def wouters_kernel(x_ref, w1_ref, b1_ref, w2_ref, b2_ref, w3_ref, b3_ref,
                   out_ref):
    # x: (TB, L) f32.  AvgPool1d(2) is already folded into w1 (see wrapper),
    # so layer 1 contracts directly over the raw trace length L.
    x = x_ref[...]

    h1 = _selu(jnp.dot(x, w1_ref[...],
                       preferred_element_type=jnp.float32) + b1_ref[...])
    h2 = _selu(jnp.dot(h1, w2_ref[...],
                       preferred_element_type=jnp.float32) + b2_ref[...])
    logits = jnp.dot(h2, w3_ref[...],
                     preferred_element_type=jnp.float32) + b3_ref[...]

    out_ref[...] = logits.astype(out_ref.dtype)


def wouters_net_forward(x_ncl, params, *, batch_tile=512):
    """x_ncl: (B, 1, L) float32.  Returns (B, n_classes) float32."""
    assert x_ncl.ndim == 3 and x_ncl.shape[1] == 1, "expected (B, 1, L)"
    x = x_ncl[:, 0, :].astype(jnp.float32)              # (B, L)
    B, L = x.shape
    L_even = (L // 2) * 2                                # AvgPool1d drops odd tail
    x = x[:, :L_even]

    n_classes = params["w3"].shape[0]
    H = HIDDEN_PAD
    c_pad = _round_up(max(n_classes, 1), 128)

    # --- weight preparation (host side, one-time) -------------------------
    # Fold the avg-pool into W1 and pre-transpose everything to (in, out),
    # zero-padding feature dims to lane-dense widths.  Padded columns see
    # zero weights + zero bias, SELU(0)=0, so padding never leaks.
    w1_pool = jnp.repeat(params["w1"].T, 2, axis=0) * 0.5          # (L_even, 10)
    w1p = jnp.zeros((L_even, H), jnp.float32).at[:, :10].set(w1_pool)
    b1p = jnp.zeros((1, H), jnp.float32).at[0, :10].set(params["b1"])
    w2p = jnp.zeros((H, H), jnp.float32).at[:10, :10].set(params["w2"].T)
    b2p = jnp.zeros((1, H), jnp.float32).at[0, :10].set(params["b2"])
    w3p = jnp.zeros((H, c_pad), jnp.float32).at[:10, :n_classes].set(
        params["w3"].T)
    b3p = jnp.zeros((1, c_pad), jnp.float32).at[0, :n_classes].set(params["b3"])

    # --- batch tiling -------------------------------------------------------
    tb = min(batch_tile, _round_up(B, 8))
    b_pad = _round_up(B, tb)
    if b_pad != B:
        x = jnp.pad(x, ((0, b_pad - B), (0, 0)))
    grid = (b_pad // tb,)

    def resident(shape):
        return pl.BlockSpec(shape, lambda i: (0, 0))

    # VMEM budget: double-buffered x/out tiles + resident weights +
    # intermediate headroom.  Capped at 48 MiB so it fits v7x's 64 MiB VMEM.
    step_bytes = 4 * (2 * tb * (L_even + c_pad)
                      + L_even * H + H * H + H * c_pad + 3 * H
                      + 3 * tb * H)
    vmem_limit = int(min(48 * 2**20, max(32 * 2**20, 2 * step_bytes)))

    cost = pl.CostEstimate(
        flops=2 * b_pad * (L_even * H + H * H + H * c_pad),
        transcendentals=2 * b_pad * H,
        bytes_accessed=4 * (b_pad * (L_even + c_pad)
                            + L_even * H + H * H + H * c_pad),
    )

    out = pl.pallas_call(
        wouters_kernel,
        out_shape=jax.ShapeDtypeStruct((b_pad, c_pad), jnp.float32),
        grid=grid,
        in_specs=[
            pl.BlockSpec((tb, L_even), lambda i: (i, 0)),   # x: streamed per tile
            resident((L_even, H)), resident((1, H)),        # w1', b1
            resident((H, H)), resident((1, H)),             # w2,  b2
            resident((H, c_pad)), resident((1, c_pad)),     # w3,  b3
        ],
        out_specs=pl.BlockSpec((tb, c_pad), lambda i: (i, 0)),
        compiler_params=pltpu.CompilerParams(
            dimension_semantics=("parallel",),
            vmem_limit_bytes=vmem_limit),
        cost_estimate=cost,
    )(x, w1p, b1p, w2p, b2p, w3p, b3p)

    return out[:B, :n_classes]


def init_params(key, trace_len, n_classes):
    """Deterministic PyTorch-style (uniform +/- 1/sqrt(fan_in)) init."""
    def linear(k, fan_in, fan_out):
        kw, kb = jax.random.split(k)
        bound = 1.0 / jnp.sqrt(jnp.float32(fan_in))
        w = jax.random.uniform(kw, (fan_out, fan_in), jnp.float32,
                               -bound, bound)
        b = jax.random.uniform(kb, (fan_out,), jnp.float32, -bound, bound)
        return w, b

    k1, k2, k3 = jax.random.split(key, 3)
    w1, b1 = linear(k1, trace_len // 2, 10)
    w2, b2 = linear(k2, 10, 10)
    w3, b3 = linear(k3, 10, n_classes)
    return dict(w1=w1, b1=b1, w2=w2, b2=b2, w3=w3, b3=b3)


def reference_forward(x_ncl, params):
    """Pure-JAX reference mirroring the PyTorch module."""
    x = x_ncl[:, 0, :]
    L_even = (x.shape[1] // 2) * 2
    x = x[:, :L_even]
    pooled = (x[:, 0::2] + x[:, 1::2]) * 0.5
    h1 = _selu(pooled @ params["w1"].T + params["b1"])
    h2 = _selu(h1 @ params["w2"].T + params["b2"])
    return h2 @ params["w3"].T + params["b3"]


if __name__ == "__main__":
    B, C, L = 8, 1, 32          # small ASCAD-like shapes: (batch, 1, trace_len)
    N_CLASSES = 16

    key = jax.random.PRNGKey(0)
    kx, kp = jax.random.split(key)
    x = jax.random.normal(kx, (B, C, L), dtype=jnp.float32)
    params = init_params(kp, L, N_CLASSES)

    out = wouters_net_forward(x, params)
    out = jax.block_until_ready(out)

    ref = reference_forward(x, params)
    assert out.shape == (B, N_CLASSES)
    assert jnp.allclose(out, ref, atol=1e-4, rtol=1e-4), "mismatch vs reference"

    print("KERNEL_OK")
</pallas_src>

<mosaic_0001>
module attributes {stable_mosaic.version = 11 : i64} {
  func.func @wouters_kernel(%arg0: i32, %arg1: memref<8x32xf32, #tpu.memory_space<vmem>>, %arg2: memref<32x128xf32, #tpu.memory_space<vmem>>, %arg3: memref<1x128xf32, #tpu.memory_space<vmem>>, %arg4: memref<128x128xf32, #tpu.memory_space<vmem>>, %arg5: memref<1x128xf32, #tpu.memory_space<vmem>>, %arg6: memref<128x128xf32, #tpu.memory_space<vmem>>, %arg7: memref<1x128xf32, #tpu.memory_space<vmem>>, %arg8: memref<8x128xf32, #tpu.memory_space<vmem>>) attributes {dimension_semantics = [#tpu.dimension_semantics<parallel>], iteration_bounds = array<i64: 1>, scalar_prefetch = 0 : i64, scratch_operands = 0 : i64, tpu.core_type = #tpu.core_type<tc>, window_params = [{transform_indices = @transform_0, window_bounds = array<i64: 8, 32>}, {pipeline_mode = #tpu.pipeline_mode<synchronous>, transform_indices = @transform_1, window_bounds = array<i64: 32, 128>}, {pipeline_mode = #tpu.pipeline_mode<synchronous>, transform_indices = @transform_2, window_bounds = array<i64: 1, 128>}, {pipeline_mode = #tpu.pipeline_mode<synchronous>, transform_indices = @transform_3, window_bounds = array<i64: 128, 128>}, {pipeline_mode = #tpu.pipeline_mode<synchronous>, transform_indices = @transform_4, window_bounds = array<i64: 1, 128>}, {pipeline_mode = #tpu.pipeline_mode<synchronous>, transform_indices = @transform_5, window_bounds = array<i64: 128, 128>}, {pipeline_mode = #tpu.pipeline_mode<synchronous>, transform_indices = @transform_6, window_bounds = array<i64: 1, 128>}, {transform_indices = @transform_7, window_bounds = array<i64: 8, 128>}]} {
    %c0 = arith.constant 0 : index
    %c0_0 = arith.constant 0 : index
    %0 = vector.load %arg1[%c0, %c0_0] : memref<8x32xf32, #tpu.memory_space<vmem>>, vector<8x32xf32>
    %c0_1 = arith.constant 0 : index
    %c0_2 = arith.constant 0 : index
    %1 = vector.load %arg2[%c0_1, %c0_2] : memref<32x128xf32, #tpu.memory_space<vmem>>, vector<32x128xf32>
    %cst = arith.constant dense<0.000000e+00> : vector<8x128xf32>
    %2 = tpu.matmul %0, %1, %cst {dimension_numbers = #tpu.dot_dimension_numbers<[1], [0], [0], [1], [0, 0, 1, 1], [], []>} : vector<8x32xf32>, vector<32x128xf32>, vector<8x128xf32> -> vector<8x128xf32>
    %c0_3 = arith.constant 0 : index
    %c0_4 = arith.constant 0 : index
    %3 = vector.load %arg3[%c0_3, %c0_4] : memref<1x128xf32, #tpu.memory_space<vmem>>, vector<1x128xf32>
    %4 = vector.broadcast %3 : vector<1x128xf32> to vector<8x128xf32>
    %5 = arith.addf %2, %4 : vector<8x128xf32>
    %cst_5 = arith.constant 0.000000e+00 : f32
    %6 = vector.broadcast %cst_5 : f32 to vector<8x128xf32>
    %7 = arith.minimumf %5, %6 : vector<8x128xf32>
    %cst_6 = arith.constant 0.000000e+00 : f32
    %8 = vector.broadcast %cst_6 : f32 to vector<8x128xf32>
    %9 = arith.cmpf ogt, %5, %8 : vector<8x128xf32>
    %cst_7 = arith.constant 1.05070102 : f32
    %10 = vector.broadcast %cst_7 : f32 to vector<8x128xf32>
    %11 = arith.mulf %10, %5 : vector<8x128xf32>
    %12 = math.exp %7 : vector<8x128xf32>
    %cst_8 = arith.constant 1.000000e+00 : f32
    %13 = vector.broadcast %cst_8 : f32 to vector<8x128xf32>
    %14 = arith.subf %12, %13 : vector<8x128xf32>
    %cst_9 = arith.constant 1.75809932 : f32
    %15 = vector.broadcast %cst_9 : f32 to vector<8x128xf32>
    %16 = arith.mulf %15, %14 : vector<8x128xf32>
    %17 = arith.select %9, %11, %16 : vector<8x128xi1>, vector<8x128xf32>
    %c0_10 = arith.constant 0 : index
    %c0_11 = arith.constant 0 : index
    %18 = vector.load %arg4[%c0_10, %c0_11] : memref<128x128xf32, #tpu.memory_space<vmem>>, vector<128x128xf32>
    %cst_12 = arith.constant dense<0.000000e+00> : vector<8x128xf32>
    %19 = tpu.matmul %17, %18, %cst_12 {dimension_numbers = #tpu.dot_dimension_numbers<[1], [0], [0], [1], [0, 0, 1, 1], [], []>} : vector<8x128xf32>, vector<128x128xf32>, vector<8x128xf32> -> vector<8x128xf32>
    %c0_13 = arith.constant 0 : index
    %c0_14 = arith.constant 0 : index
    %20 = vector.load %arg5[%c0_13, %c0_14] : memref<1x128xf32, #tpu.memory_space<vmem>>, vector<1x128xf32>
    %21 = vector.broadcast %20 : vector<1x128xf32> to vector<8x128xf32>
    %22 = arith.addf %19, %21 : vector<8x128xf32>
    %cst_15 = arith.constant 0.000000e+00 : f32
    %23 = vector.broadcast %cst_15 : f32 to vector<8x128xf32>
    %24 = arith.minimumf %22, %23 : vector<8x128xf32>
    %cst_16 = arith.constant 0.000000e+00 : f32
    %25 = vector.broadcast %cst_16 : f32 to vector<8x128xf32>
    %26 = arith.cmpf ogt, %22, %25 : vector<8x128xf32>
    %cst_17 = arith.constant 1.05070102 : f32
    %27 = vector.broadcast %cst_17 : f32 to vector<8x128xf32>
    %28 = arith.mulf %27, %22 : vector<8x128xf32>
    %29 = math.exp %24 : vector<8x128xf32>
    %cst_18 = arith.constant 1.000000e+00 : f32
    %30 = vector.broadcast %cst_18 : f32 to vector<8x128xf32>
    %31 = arith.subf %29, %30 : vector<8x128xf32>
    %cst_19 = arith.constant 1.75809932 : f32
    %32 = vector.broadcast %cst_19 : f32 to vector<8x128xf32>
    %33 = arith.mulf %32, %31 : vector<8x128xf32>
    %34 = arith.select %26, %28, %33 : vector<8x128xi1>, vector<8x128xf32>
    %c0_20 = arith.constant 0 : index
    %c0_21 = arith.constant 0 : index
    %35 = vector.load %arg6[%c0_20, %c0_21] : memref<128x128xf32, #tpu.memory_space<vmem>>, vector<128x128xf32>
    %cst_22 = arith.constant dense<0.000000e+00> : vector<8x128xf32>
    %36 = tpu.matmul %34, %35, %cst_22 {dimension_numbers = #tpu.dot_dimension_numbers<[1], [0], [0], [1], [0, 0, 1, 1], [], []>} : vector<8x128xf32>, vector<128x128xf32>, vector<8x128xf32> -> vector<8x128xf32>
    %c0_23 = arith.constant 0 : index
    %c0_24 = arith.constant 0 : index
    %37 = vector.load %arg7[%c0_23, %c0_24] : memref<1x128xf32, #tpu.memory_space<vmem>>, vector<1x128xf32>
    %38 = vector.broadcast %37 : vector<1x128xf32> to vector<8x128xf32>
    %39 = arith.addf %36, %38 : vector<8x128xf32>
    %c0_25 = arith.constant 0 : index
    %c0_26 = arith.constant 0 : index
    %40 = vector.load %arg8[%c0_25, %c0_26] : memref<8x128xf32, #tpu.memory_space<vmem>>, vector<8x128xf32>
    tpu.vector_store %arg8[%c0_25, %c0_26], %39 {strides = array<i32>} : memref<8x128xf32, #tpu.memory_space<vmem>>, vector<8x128xf32>,
    return
  }
  func.func @transform_0(%arg0: i32) -> (i32, i32) {
    %c0_i32 = arith.constant 0 : i32
    %c0_i32_0 = arith.constant 0 : i32
    return %arg0, %c0_i32 : i32, i32
  }
  func.func @transform_1(%arg0: i32) -> (i32, i32) {
    %c0_i32 = arith.constant 0 : i32
    %c0_i32_0 = arith.constant 0 : i32
    %c0_i32_1 = arith.constant 0 : i32
    return %c0_i32, %c0_i32_0 : i32, i32
  }
  func.func @transform_2(%arg0: i32) -> (i32, i32) {
    %c0_i32 = arith.constant 0 : i32
    %c0_i32_0 = arith.constant 0 : i32
    %c0_i32_1 = arith.constant 0 : i32
    return %c0_i32, %c0_i32_0 : i32, i32
  }
  func.func @transform_3(%arg0: i32) -> (i32, i32) {
    %c0_i32 = arith.constant 0 : i32
    %c0_i32_0 = arith.constant 0 : i32
    %c0_i32_1 = arith.constant 0 : i32
    return %c0_i32, %c0_i32_0 : i32, i32
  }
  func.func @transform_4(%arg0: i32) -> (i32, i32) {
    %c0_i32 = arith.constant 0 : i32
    %c0_i32_0 = arith.constant 0 : i32
    %c0_i32_1 = arith.constant 0 : i32
    return %c0_i32, %c0_i32_0 : i32, i32
  }
  func.func @transform_5(%arg0: i32) -> (i32, i32) {
    %c0_i32 = arith.constant 0 : i32
    %c0_i32_0 = arith.constant 0 : i32
    %c0_i32_1 = arith.constant 0 : i32
    return %c0_i32, %c0_i32_0 : i32, i32
  }
  func.func @transform_6(%arg0: i32) -> (i32, i32) {
    %c0_i32 = arith.constant 0 : i32
    %c0_i32_0 = arith.constant 0 : i32
    %c0_i32_1 = arith.constant 0 : i32
    return %c0_i32, %c0_i32_0 : i32, i32
  }
  func.func @transform_7(%arg0: i32) -> (i32, i32) {
    %c0_i32 = arith.constant 0 : i32
    %c0_i32_0 = arith.constant 0 : i32
    return %arg0, %c0_i32 : i32, i32
  }
}

</mosaic_0001>

<llo_original>
// kernel: tpu_custom_call.1
$region0: #{tpu_custom_call.1}
  #allocation0 [shape = 'u32[]', space=smem, size = 0x4, offset = 0x4, fixed_abs, tag = 'smem constant byte address 0x4 - core index']
  #allocation1 [shape = 'u32[144,128]{1,0:T(1,128)}', space=vmem, size = 0x12000, scoped, tag = 'internal scratch']
  %s0 = inlined_call_operand.hbm [shape: f32[8,32], index: 0, kind: input, shape index: {}]
  %s1 = inlined_call_operand.hbm [shape: f32[32,128], index: 1, kind: input, shape index: {}]
  %s2 = inlined_call_operand.vmem [shape: f32[1,128], index: 2, kind: input, shape index: {}]
  %s3 = inlined_call_operand.hbm [shape: f32[128,128], index: 3, kind: input, shape index: {}]
  %s4 = inlined_call_operand.vmem [shape: f32[1,128], index: 4, kind: input, shape index: {}]
  %s5 = inlined_call_operand.hbm [shape: f32[128,128], index: 5, kind: input, shape index: {}]
  %s6 = inlined_call_operand.vmem [shape: f32[1,128], index: 6, kind: input, shape index: {}]
  %s7 = inlined_call_operand.hbm [shape: f32[8,128], index: 7, kind: output, shape index: {}]
  %s8 = sld [smem:[#allocation0]]
  $region54: #{tpu_custom_call.1} parent=0
    _
  %s10 = ssub.s32 1, %s8
  %s11 = scalar_select 0, %s10, %s8
  $region1: #{tpu_custom_call.1} parent=0
    #allocation2 [shape = 'u8[4096]{0}', space=vmem, size = 0x1000, scoped, tag = 'input window, operand 0, single buffered']
    #allocation3 [shape = 's32[1]{0}', space=sflag, size = 0x4, scoped, tag = 'scoped memory for tpu_custom_call.1']
    #allocation4 [shape = 's32[1]{0}', space=sflag, size = 0x4, scoped, tag = 'scoped memory for tpu_custom_call.1']
    #allocation5 [shape = 'u8[16384]{0}', space=vmem, size = 0x4000, scoped, tag = 'input window, operand 1, single buffered']
    #allocation6 [shape = 's32[1]{0}', space=sflag, size = 0x4, scoped, tag = 'scoped memory for tpu_custom_call.1']
    #allocation7 [shape = 'u8[65536]{0}', space=vmem, size = 0x10000, scoped, tag = 'input window, operand 3, single buffered']
    #allocation8 [shape = 'u8[65536]{0}', space=vmem, size = 0x10000, scoped, tag = 'input window, operand 5, single buffered']
    #allocation9 [shape = 's32[1]{0}', space=sflag, size = 0x4, scoped, tag = 'scoped memory for tpu_custom_call.1']
    #allocation10 [shape = 'u8[4096]{0}', space=vmem, size = 0x1000, scoped, tag = 'output window, operand 0, single buffered']
    %12 = vsyncpa [#allocation3], 0
    %13 = vsyncpa [#allocation6], 0
    %14 = vsyncpa [#allocation9], 0
    %15 = vsyncpa [#allocation4], 0
    // Predicated region
    $region2: #{tpu_custom_call.1} parent=1 // pred_check
      _
    $region3: #{tpu_custom_call.1} parent=1 // pred_check_branch
      %17 = sbr.rel (0) target = $region5
    $region4: #{tpu_custom_call.1} parent=1 // pred_region
      %s19 = ssub.s32 128, 128
      %20 = vsyncadd [#allocation3], %s19
      %s22 = sshll.u32 [#allocation2], 4
      %s23 = int_to_ptr.vmem [resolvable:$true] %s22
      %25 = dma.hbm_to_vmem [thread:$0]  %s0, 128, %s23, [#allocation3]
    $region5: #{tpu_custom_call.1} parent=1 // pred_fallthru
      _
    // Predicated region
    $region6: #{tpu_custom_call.1} parent=1 // pred_check
      _
    $region7: #{tpu_custom_call.1} parent=1 // pred_check_branch
      %27 = sbr.rel (0) target = $region9
    $region8: #{tpu_custom_call.1} parent=1 // pred_region
      %s29 = ssub.s32 512, 512
      %30 = vsyncadd [#allocation6], %s29
      %s31 = sshll.u32 [#allocation5], 4
      %s32 = int_to_ptr.vmem [resolvable:$true] %s31
      %37 = dma.hbm_to_vmem [thread:$0]  %s1, 512, %s32, [#allocation6], 128, 128, 8
    $region9: #{tpu_custom_call.1} parent=1 // pred_fallthru
      _
    // Predicated region
    $region10: #{tpu_custom_call.1} parent=1 // pred_check
      _
    $region11: #{tpu_custom_call.1} parent=1 // pred_check_branch
      %39 = sbr.rel (0) target = $region13
    $region12: #{tpu_custom_call.1} parent=1 // pred_region
      _
    $region13: #{tpu_custom_call.1} parent=1 // pred_fallthru
      _
    // Predicated region
    $region14: #{tpu_custom_call.1} parent=1 // pred_check
      _
    $region15: #{tpu_custom_call.1} parent=1 // pred_check_branch
      %41 = sbr.rel (0) target = $region17
    $region16: #{tpu_custom_call.1} parent=1 // pred_region
      %s43 = ssub.s32 2048, 2048
      %44 = vsyncadd [#allocation6], %s43
      %s45 = sshll.u32 [#allocation7], 4
      %s46 = int_to_ptr.vmem [resolvable:$true] %s45
      %51 = dma.hbm_to_vmem [thread:$0]  %s3, 2048, %s46, [#allocation6], 128, 128, 8
    $region17: #{tpu_custom_call.1} parent=1 // pred_fallthru
      _
    // Predicated region
    $region18: #{tpu_custom_call.1} parent=1 // pred_check
      _
    $region19: #{tpu_custom_call.1} parent=1 // pred_check_branch
      %53 = sbr.rel (0) target = $region21
    $region20: #{tpu_custom_call.1} parent=1 // pred_region
      _
    $region21: #{tpu_custom_call.1} parent=1 // pred_fallthru
      _
    // Predicated region
    $region22: #{tpu_custom_call.1} parent=1 // pred_check
      _
    $region23: #{tpu_custom_call.1} parent=1 // pred_check_branch
      %55 = sbr.rel (0) target = $region25
    $region24: #{tpu_custom_call.1} parent=1 // pred_region
      %s57 = ssub.s32 2048, 2048
      %58 = vsyncadd [#allocation9], %s57
      %s59 = sshll.u32 [#allocation8], 4
      %s60 = int_to_ptr.vmem [resolvable:$true] %s59
      %65 = dma.hbm_to_vmem [thread:$0]  %s5, 2048, %s60, [#allocation9], 128, 128, 8
    $region25: #{tpu_custom_call.1} parent=1 // pred_fallthru
      _
    // Predicated region
    $region26: #{tpu_custom_call.1} parent=1 // pred_check
      _
    $region27: #{tpu_custom_call.1} parent=1 // pred_check_branch
      %67 = sbr.rel (0) target = $region29
    $region28: #{tpu_custom_call.1} parent=1 // pred_region
      _
    $region29: #{tpu_custom_call.1} parent=1 // pred_fallthru
      _
    // Predicated region
    $region30: #{tpu_custom_call.1} parent=1 // pred_check
      _
    $region31: #{tpu_custom_call.1} parent=1 // pred_check_branch
      %69 = sbr.rel (0) target = $region33
    $region32: #{tpu_custom_call.1} parent=1 // pred_region
      %70 = dma.done [#allocation3], 128
    $region33: #{tpu_custom_call.1} parent=1 // pred_fallthru
      _
    // Predicated region
    $region34: #{tpu_custom_call.1} parent=1 // pred_check
      _
    $region35: #{tpu_custom_call.1} parent=1 // pred_check_branch
      %72 = sbr.rel (0) target = $region37
    $region36: #{tpu_custom_call.1} parent=1 // pred_region
      %73 = dma.done [#allocation6], 512
    $region37: #{tpu_custom_call.1} parent=1 // pred_fallthru
      _
    // Predicated region
    $region38: #{tpu_custom_call.1} parent=1 // pred_check
      _
    $region39: #{tpu_custom_call.1} parent=1 // pred_check_branch
      %75 = sbr.rel (0) target = $region41
    $region40: #{tpu_custom_call.1} parent=1 // pred_region
      %76 = dma.done [#allocation6], 2048
    $region41: #{tpu_custom_call.1} parent=1 // pred_fallthru
      _
    // Predicated region
    $region42: #{tpu_custom_call.1} parent=1 // pred_check
      _
    $region43: #{tpu_custom_call.1} parent=1 // pred_check_branch
      %78 = sbr.rel (0) target = $region45
    $region44: #{tpu_custom_call.1} parent=1 // pred_region
      %79 = dma.done [#allocation9], 2048
    $region45: #{tpu_custom_call.1} parent=1 // pred_fallthru
      _
    %v80 = vld [vmem:[#allocation2] sm:$0xff]
    %v81 = vld [vmem:[#allocation5] sm:$0xff]
    %v82 = vld [vmem:[#allocation5 + $0x8] sm:$0xff]
    %v83 = vld [vmem:[#allocation5 + $0x10] sm:$0xff]
    %v84 = vld [vmem:[#allocation5 + $0x18] sm:$0xff]
    %v85 = vld [vmem:[%s2] sm:$0x1]
    %v87 = vlaneseq
    %v88 = vshrl.u32 %v87, 7
    %v89 = vsub.s32 0, %v88
    %v90 = vrot.slane %v85, %v89
    %vm92 = vcmask 261120
    %v94 = vsel %vm92, %v80, 0
    %96 = vmatprep.subr.mxu0 0.0
    %97 = vmatpush1.msra.mxu0 %v81
    %98 = vmatprep.subr.mxu0 0.0
    %99 = vmatpush1.msra.mxu0 %v82
    %100 = vmatprep.subr.mxu0 0.0
    %101 = vmatpush1.msra.mxu0 %v83
    %102 = vmatprep.subr.mxu0 0.0
    %103 = vmatpush1.msra.mxu0 %v84
    %104 = vmatprep.subr.mxu0 0.0
    %105 = vmatpush1.msra.mxu0 0.0
    %106 = vmatprep.subr.mxu0 0.0
    %107 = vmatpush1.msra.mxu0 0.0
    %108 = vmatprep.subr.mxu0 0.0
    %109 = vmatpush1.msra.mxu0 0.0
    %110 = vmatprep.subr.mxu0 0.0
    %111 = vmatpush1.msra.mxu0 0.0
    %112 = vmatprep.subr.mxu0 0.0
    %113 = vmatpush1.msra.mxu0 0.0
    %114 = vmatprep.subr.mxu0 0.0
    %115 = vmatpush1.msra.mxu0 0.0
    %116 = vmatprep.subr.mxu0 0.0
    %117 = vmatpush1.msra.mxu0 0.0
    %118 = vmatprep.subr.mxu0 0.0
    %119 = vmatpush1.msra.mxu0 0.0
    %120 = vmatprep.subr.mxu0 0.0
    %121 = vmatpush1.msra.mxu0 0.0
    %122 = vmatprep.subr.mxu0 0.0
    %123 = vmatpush1.msra.mxu0 0.0
    %124 = vmatprep.subr.mxu0 0.0
    %125 = vmatpush1.msra.mxu0 0.0
    %126 = vmatprep.subr.mxu0 0.0
    %127 = vmatpush1.msra.mxu0 0.0
    %128 = vmatprep.subr.mxu0 0.0
    %129 = vmatpush1.msra.mxu0 0.0
    %130 = vmatprep.subr.mxu0 0.0
    %131 = vmatpush1.msra.mxu0 0.0
    %132 = vmatprep.subr.mxu0 0.0
    %133 = vmatpush1.msra.mxu0 0.0
    %134 = vmatprep.subr.mxu0 0.0
    %135 = vmatpush1.msra.mxu0 0.0
    %136 = vmatprep.subr.mxu0 0.0
    %137 = vmatpush1.msra.mxu0 0.0
    %138 = vmatprep.subr.mxu0 0.0
    %139 = vmatpush1.msra.mxu0 0.0
    %140 = vmatprep.subr.mxu0 0.0
    %141 = vmatpush1.msra.mxu0 0.0
    %142 = vmatprep.subr.mxu0 0.0
    %143 = vmatpush1.msra.mxu0 0.0
    %144 = vmatprep.subr.mxu0 0.0
    %145 = vmatpush1.msra.mxu0 0.0
    %146 = vmatprep.subr.mxu0 0.0
    %147 = vmatpush1.msra.mxu0 0.0
    %148 = vmatprep.subr.mxu0 0.0
    %149 = vmatpush1.msra.mxu0 0.0
    %150 = vmatprep.subr.mxu0 0.0
    %151 = vmatpush1.msra.mxu0 0.0
    %152 = vmatprep.subr.mxu0 0.0
    %153 = vmatpush1.msra.mxu0 0.0
    %154 = vmatprep.subr.mxu0 0.0
    %155 = vmatpush1.msra.mxu0 0.0
    %156 = vmatprep.subr.mxu0 0.0
    %157 = vmatpush1.msra.mxu0 0.0
    %158 = vmatprep.subr.mxu0 0.0
    %159 = vmatpush1.msra.mxu0 0.0
    %160 = vmatprep.mubr.f32.mxu0 0.0
    %161 = vmatmul.mubr.f32.gmra.mrb[0].mxu0 %v94
    %v162 = vpop.f32.mrb[0].mxu0
    %v163 = vadd.f32 %v90, %v162
    %v164 = vpop.f32.mrb[0].mxu0
    %165 = vdwg.mxu0
    %v166 = vmin.f32 %v163, 0.0
    %vm167 = vcmp.gt.f32.partialorder %v163, 0.0
    %v168 = vmul.f32 %v163, 1.050701
    %v169 = vmul.f32 %v166, 1.442695
    %v170 = vpow.pop %v169
    %v171 = vsub.f32 %v170, 1.0
    %v172 = vmul.f32 %v171, 1.7580993
    %v173 = vsel %vm167, %v168, %v172
    %v174 = vld [vmem:[#allocation7] sm:$0xff]
    %v175 = vld [vmem:[#allocation7 + $0x8] sm:$0xff]
    %v176 = vld [vmem:[#allocation7 + $0x10] sm:$0xff]
    %v177 = vld [vmem:[#allocation7 + $0x18] sm:$0xff]
    %v178 = vld [vmem:[#allocation7 + $0x20] sm:$0xff]
    %v179 = vld [vmem:[#allocation7 + $0x28] sm:$0xff]
    %v180 = vld [vmem:[#allocation7 + $0x30] sm:$0xff]
    %v181 = vld [vmem:[#allocation7 + $0x38] sm:$0xff]
    %v182 = vld [vmem:[#allocation7 + $0x40] sm:$0xff]
    %v183 = vld [vmem:[#allocation7 + $0x48] sm:$0xff]
    %v184 = vld [vmem:[#allocation7 + $0x50] sm:$0xff]
    %v185 = vld [vmem:[#allocation7 + $0x58] sm:$0xff]
    %v186 = vld [vmem:[#allocation7 + $0x60] sm:$0xff]
    %v187 = vld [vmem:[#allocation7 + $0x68] sm:$0xff]
    %v188 = vld [vmem:[#allocation7 + $0x70] sm:$0xff]
    %v189 = vld [vmem:[#allocation7 + $0x78] sm:$0xff]
    %v190 = vld [vmem:[%s4] sm:$0x1]
    %v192 = vlaneseq
    %v193 = vshrl.u32 %v192, 7
    %v194 = vsub.s32 0, %v193
    %v195 = vrot.slane %v190, %v194
    %197 = vmatprep.subr.mxu0 0.0
    %198 = vmatpush1.msra.mxu0 %v174
    %199 = vmatprep.subr.mxu0 0.0
    %200 = vmatpush1.msra.mxu0 %v175
    %201 = vmatprep.subr.mxu0 0.0
    %202 = vmatpush1.msra.mxu0 %v176
    %203 = vmatprep.subr.mxu0 0.0
    %204 = vmatpush1.msra.mxu0 %v177
    %205 = vmatprep.subr.mxu0 0.0
    %206 = vmatpush1.msra.mxu0 %v178
    %207 = vmatprep.subr.mxu0 0.0
    %208 = vmatpush1.msra.mxu0 %v179
    %209 = vmatprep.subr.mxu0 0.0
    %210 = vmatpush1.msra.mxu0 %v180
    %211 = vmatprep.subr.mxu0 0.0
    %212 = vmatpush1.msra.mxu0 %v181
    %213 = vmatprep.subr.mxu0 0.0
    %214 = vmatpush1.msra.mxu0 %v182
    %215 = vmatprep.subr.mxu0 0.0
    %216 = vmatpush1.msra.mxu0 %v183
    %217 = vmatprep.subr.mxu0 0.0
    %218 = vmatpush1.msra.mxu0 %v184
    %219 = vmatprep.subr.mxu0 0.0
    %220 = vmatpush1.msra.mxu0 %v185
    %221 = vmatprep.subr.mxu0 0.0
    %222 = vmatpush1.msra.mxu0 %v186
    %223 = vmatprep.subr.mxu0 0.0
    %224 = vmatpush1.msra.mxu0 %v187
    %225 = vmatprep.subr.mxu0 0.0
    %226 = vmatpush1.msra.mxu0 %v188
    %227 = vmatprep.subr.mxu0 0.0
    %228 = vmatpush1.msra.mxu0 %v189
    %229 = vmatprep.subr.mxu0 0.0
    %230 = vmatpush1.msra.mxu0 0.0
    %231 = vmatprep.subr.mxu0 0.0
    %232 = vmatpush1.msra.mxu0 0.0
    %233 = vmatprep.subr.mxu0 0.0
    %234 = vmatpush1.msra.mxu0 0.0
    %235 = vmatprep.subr.mxu0 0.0
    %236 = vmatpush1.msra.mxu0 0.0
    %237 = vmatprep.subr.mxu0 0.0
    %238 = vmatpush1.msra.mxu0 0.0
    %239 = vmatprep.subr.mxu0 0.0
    %240 = vmatpush1.msra.mxu0 0.0
    %241 = vmatprep.subr.mxu0 0.0
    %242 = vmatpush1.msra.mxu0 0.0
    %243 = vmatprep.subr.mxu0 0.0
    %244 = vmatpush1.msra.mxu0 0.0
    %245 = vmatprep.subr.mxu0 0.0
    %246 = vmatpush1.msra.mxu0 0.0
    %247 = vmatprep.subr.mxu0 0.0
    %248 = vmatpush1.msra.mxu0 0.0
    %249 = vmatprep.subr.mxu0 0.0
    %250 = vmatpush1.msra.mxu0 0.0
    %251 = vmatprep.subr.mxu0 0.0
    %252 = vmatpush1.msra.mxu0 0.0
    %253 = vmatprep.subr.mxu0 0.0
    %254 = vmatpush1.msra.mxu0 0.0
    %255 = vmatprep.subr.mxu0 0.0
    %256 = vmatpush1.msra.mxu0 0.0
    %257 = vmatprep.subr.mxu0 0.0
    %258 = vmatpush1.msra.mxu0 0.0
    %259 = vmatprep.subr.mxu0 0.0
    %260 = vmatpush1.msra.mxu0 0.0
    %261 = vmatprep.mubr.f32.mxu0 0.0
    %262 = vmatmul.mubr.f32.gmra.mrb[0].mxu0 %v173
    %v263 = vpop.f32.mrb[0].mxu0
    %v264 = vadd.f32 %v195, %v263
    %v265 = vpop.f32.mrb[0].mxu0
    %266 = vdwg.mxu0
    %v267 = vmin.f32 %v264, 0.0
    %vm268 = vcmp.gt.f32.partialorder %v264, 0.0
    %v269 = vmul.f32 %v264, 1.050701
    %v270 = vmul.f32 %v267, 1.442695
    %v271 = vpow.pop %v270
    %v272 = vsub.f32 %v271, 1.0
    %v273 = vmul.f32 %v272, 1.7580993
    %v274 = vsel %vm268, %v269, %v273
    %v275 = vld [vmem:[#allocation8] sm:$0xff]
    %v276 = vld [vmem:[#allocation8 + $0x8] sm:$0xff]
    %v277 = vld [vmem:[#allocation8 + $0x10] sm:$0xff]
    %v278 = vld [vmem:[#allocation8 + $0x18] sm:$0xff]
    %v279 = vld [vmem:[#allocation8 + $0x20] sm:$0xff]
    %v280 = vld [vmem:[#allocation8 + $0x28] sm:$0xff]
    %v281 = vld [vmem:[#allocation8 + $0x30] sm:$0xff]
    %v282 = vld [vmem:[#allocation8 + $0x38] sm:$0xff]
    %v283 = vld [vmem:[#allocation8 + $0x40] sm:$0xff]
    %v284 = vld [vmem:[#allocation8 + $0x48] sm:$0xff]
    %v285 = vld [vmem:[#allocation8 + $0x50] sm:$0xff]
    %v286 = vld [vmem:[#allocation8 + $0x58] sm:$0xff]
    %v287 = vld [vmem:[#allocation8 + $0x60] sm:$0xff]
    %v288 = vld [vmem:[#allocation8 + $0x68] sm:$0xff]
    %v289 = vld [vmem:[#allocation8 + $0x70] sm:$0xff]
    %v290 = vld [vmem:[#allocation8 + $0x78] sm:$0xff]
    %v291 = vld [vmem:[%s6] sm:$0x1]
    %v293 = vlaneseq
    %v294 = vshrl.u32 %v293, 7
    %v295 = vsub.s32 0, %v294
    %v296 = vrot.slane %v291, %v295
    %298 = vmatprep.subr.mxu0 0.0
    %299 = vmatpush1.msra.mxu0 %v275
    %300 = vmatprep.subr.mxu0 0.0
    %301 = vmatpush1.msra.mxu0 %v276
    %302 = vmatprep.subr.mxu0 0.0
    %303 = vmatpush1.msra.mxu0 %v277
    %304 = vmatprep.subr.mxu0 0.0
    %305 = vmatpush1.msra.mxu0 %v278
    %306 = vmatprep.subr.mxu0 0.0
    %307 = vmatpush1.msra.mxu0 %v279
    %308 = vmatprep.subr.mxu0 0.0
    %309 = vmatpush1.msra.mxu0 %v280
    %310 = vmatprep.subr.mxu0 0.0
    %311 = vmatpush1.msra.mxu0 %v281
    %312 = vmatprep.subr.mxu0 0.0
    %313 = vmatpush1.msra.mxu0 %v282
    %314 = vmatprep.subr.mxu0 0.0
    %315 = vmatpush1.msra.mxu0 %v283
    %316 = vmatprep.subr.mxu0 0.0
    %317 = vmatpush1.msra.mxu0 %v284
    %318 = vmatprep.subr.mxu0 0.0
    %319 = vmatpush1.msra.mxu0 %v285
    %320 = vmatprep.subr.mxu0 0.0
    %321 = vmatpush1.msra.mxu0 %v286
    %322 = vmatprep.subr.mxu0 0.0
    %323 = vmatpush1.msra.mxu0 %v287
    %324 = vmatprep.subr.mxu0 0.0
    %325 = vmatpush1.msra.mxu0 %v288
    %326 = vmatprep.subr.mxu0 0.0
    %327 = vmatpush1.msra.mxu0 %v289
    %328 = vmatprep.subr.mxu0 0.0
    %329 = vmatpush1.msra.mxu0 %v290
    %330 = vmatprep.subr.mxu0 0.0
    %331 = vmatpush1.msra.mxu0 0.0
    %332 = vmatprep.subr.mxu0 0.0
    %333 = vmatpush1.msra.mxu0 0.0
    %334 = vmatprep.subr.mxu0 0.0
    %335 = vmatpush1.msra.mxu0 0.0
    %336 = vmatprep.subr.mxu0 0.0
    %337 = vmatpush1.msra.mxu0 0.0
    %338 = vmatprep.subr.mxu0 0.0
    %339 = vmatpush1.msra.mxu0 0.0
    %340 = vmatprep.subr.mxu0 0.0
    %341 = vmatpush1.msra.mxu0 0.0
    %342 = vmatprep.subr.mxu0 0.0
    %343 = vmatpush1.msra.mxu0 0.0
    %344 = vmatprep.subr.mxu0 0.0
    %345 = vmatpush1.msra.mxu0 0.0
    %346 = vmatprep.subr.mxu0 0.0
    %347 = vmatpush1.msra.mxu0 0.0
    %348 = vmatprep.subr.mxu0 0.0
    %349 = vmatpush1.msra.mxu0 0.0
    %350 = vmatprep.subr.mxu0 0.0
    %351 = vmatpush1.msra.mxu0 0.0
    %352 = vmatprep.subr.mxu0 0.0
    %353 = vmatpush1.msra.mxu0 0.0
    %354 = vmatprep.subr.mxu0 0.0
    %355 = vmatpush1.msra.mxu0 0.0
    %356 = vmatprep.subr.mxu0 0.0
    %357 = vmatpush1.msra.mxu0 0.0
    %358 = vmatprep.subr.mxu0 0.0
    %359 = vmatpush1.msra.mxu0 0.0
    %360 = vmatprep.subr.mxu0 0.0
    %361 = vmatpush1.msra.mxu0 0.0
    %362 = vmatprep.mubr.f32.mxu0 0.0
    %363 = vmatmul.mubr.f32.gmra.mrb[0].mxu0 %v274
    %v364 = vpop.f32.mrb[0].mxu0
    %v365 = vadd.f32 %v296, %v364
    %v366 = vpop.f32.mrb[0].mxu0
    %367 = vdwg.mxu0
    %368 = vst [vmem:[#allocation10] sm:$0xff] %v365
    // Predicated region
    $region46: #{tpu_custom_call.1} parent=1 // pred_check
      _
    $region47: #{tpu_custom_call.1} parent=1 // pred_check_branch
      %370 = sbr.rel (0) target = $region49
    $region48: #{tpu_custom_call.1} parent=1 // pred_region
      %s372 = ssub.s32 128, 128
      %373 = vsyncadd [#allocation4], %s372
      %s375 = sshll.u32 [#allocation10], 4
      %s376 = int_to_ptr.vmem [resolvable:$true] %s375
      %378 = dma.vmem_to_hbm [thread:$0]  %s376, 128, %s7, [#allocation4]
    $region49: #{tpu_custom_call.1} parent=1 // pred_fallthru
      _
    // Predicated region
    $region50: #{tpu_custom_call.1} parent=1 // pred_check
      _
    $region51: #{tpu_custom_call.1} parent=1 // pred_check_branch
      %380 = sbr.rel (0) target = $region53
    $region52: #{tpu_custom_call.1} parent=1 // pred_region
      %381 = dma.done [#allocation4], 128
    $region53: #{tpu_custom_call.1} parent=1 // pred_fallthru
      _
    %382 = vsyncpa [#allocation3], 1
    %383 = vsyncpa [#allocation6], 1
    %384 = vsyncpa [#allocation9], 1
    %385 = vsyncpa [#allocation4], 1

</llo_original>
